<compile_context>
chip_gen: v5e
topology: v5e:2x2
jax: 0.10.0
libtpu: 0.0.40
codegen_flags: <defaults>
</compile_context>

<pallas_src>
import jax
import jax.numpy as jnp
from jax.experimental import pallas as pl
from jax.experimental.pallas import tpu as pltpu

_LANES = 128          # lane width: hidden / action axes padded to this
_NEG_INF = -1e30      # finite "minus infinity" for padded action logits
_MAX_TILE_B = 512     # batch rows per grid step (tiny VMEM footprint, fits
                      # comfortably on v5e/v6e/v7x incl. 64 MiB v7x VMEM)


def _round_up(x, m):
    return (x + m - 1) // m * m


def _policy_kernel(x_ref, w1_ref, b1_ref, w2_ref, b2_ref, o_ref):
    # x_ref:  (TILE_B, num_inputs)  f32
    # w1_ref: (num_inputs, H_PAD)   f32   (hidden zero-padded to 128 lanes)
    # b1_ref: (1, H_PAD)            f32
    # w2_ref: (H_PAD, A_PAD)        bf16  (pad rows/cols are zero)
    # b2_ref: (1, A_PAD)            f32   (pad lanes hold -1e30)
    # o_ref:  (TILE_B, A_PAD)       f32   (lane-dense output slab)
    x = x_ref[...]
    w1 = w1_ref[...]
    num_inputs = x_ref.shape[1]

    # ---- layer 1: state @ W1 + b1, ReLU ---------------------------------
    # K is tiny (4): unrolled VPU broadcast-FMAs instead of a near-empty MXU
    # pass (avoids MXU push/pop latency before layer 2 on v5e/v6e).
    h = x[:, 0:1] * w1[0:1, :] + b1_ref[...]
    for k in range(1, num_inputs):
        h = h + x[:, k:k + 1] * w1[k:k + 1, :]
    h = jnp.maximum(h, 0.0)

    # ---- layer 2: h @ W2 + b2 (bf16 operands, f32 accumulation) ---------
    logits = jnp.dot(
        h.astype(jnp.bfloat16),
        w2_ref[...],
        preferred_element_type=jnp.float32,
    )
    logits = logits + b2_ref[...]

    # ---- numerically-stable softmax over the (padded) action axis -------
    m = jnp.max(logits, axis=1, keepdims=True)
    e = jnp.exp(logits - m)                    # padded lanes: exp(-1e30-m) == 0
    denom = jnp.sum(e, axis=1, keepdims=True)
    inv = pl.reciprocal(denom, approx=True)    # EUP slot; keeps VALU free
    o_ref[...] = (e * inv).astype(o_ref.dtype)


@jax.jit
def policy_network_forward(state, w1, b1, w2, b2):
    """state: (B, num_inputs); w1: (num_inputs, hidden); b1: (1, hidden);
    w2: (hidden, num_actions); b2: (1, num_actions) -> (B, num_actions)."""
    B, num_inputs = state.shape
    hidden = w1.shape[1]
    num_actions = w2.shape[1]

    h_pad = _round_up(hidden, _LANES)
    a_pad = _round_up(num_actions, _LANES)

    # Exact hidden padding (zeros); action padding pushes logits to -1e30.
    w1p = jnp.pad(w1.astype(jnp.float32), ((0, 0), (0, h_pad - hidden)))
    b1p = jnp.pad(b1.astype(jnp.float32), ((0, 0), (0, h_pad - hidden)))
    w2p = jnp.pad(w2.astype(jnp.float32),
                  ((0, h_pad - hidden), (0, a_pad - num_actions)))
    w2p = w2p.astype(jnp.bfloat16)             # cast once, outside the kernel
    b2p = jnp.pad(b2.astype(jnp.float32), ((0, 0), (0, a_pad - num_actions)),
                  constant_values=_NEG_INF)

    # Batch tiling: biggest tile up to 512 rows; pad batch to a tile multiple.
    tile_b = min(_MAX_TILE_B, _round_up(B, 8))
    b_padded = _round_up(B, tile_b)
    xp = jnp.pad(state.astype(jnp.float32), ((0, b_padded - B), (0, 0)))

    out = pl.pallas_call(
        _policy_kernel,
        out_shape=jax.ShapeDtypeStruct((b_padded, a_pad), jnp.float32),
        grid=(b_padded // tile_b,),
        in_specs=[
            # batch tile advances with the grid
            pl.BlockSpec((tile_b, num_inputs), lambda i: (i, 0)),
            # weights / biases: constant block index -> stay VMEM-resident
            pl.BlockSpec((num_inputs, h_pad), lambda i: (0, 0)),
            pl.BlockSpec((1, h_pad), lambda i: (0, 0)),
            pl.BlockSpec((h_pad, a_pad), lambda i: (0, 0)),
            pl.BlockSpec((1, a_pad), lambda i: (0, 0)),
        ],
        out_specs=pl.BlockSpec((tile_b, a_pad), lambda i: (i, 0)),
        compiler_params=pltpu.CompilerParams(
            dimension_semantics=("parallel",),      # 2x on v7x (2 TCs/chip)
            vmem_limit_bytes=32 * 1024 * 1024,      # explicit, safe on all gens
        ),
    )(xp, w1p, b1p, w2p, b2p)

    # Drop batch / action padding.
    return out[:B, :num_actions]


def init_params(key, num_inputs, num_actions, hidden_size):
    """Deterministic init mimicking nn.Linear's U(-1/sqrt(fan_in), 1/sqrt(fan_in))."""
    k1, k2, k3, k4 = jax.random.split(key, 4)
    lim1 = 1.0 / jnp.sqrt(jnp.float32(num_inputs))
    lim2 = 1.0 / jnp.sqrt(jnp.float32(hidden_size))
    # Stored as (in, out): kernel computes x @ W, equivalent to x @ W_torch^T.
    w1 = jax.random.uniform(k1, (num_inputs, hidden_size), jnp.float32, -lim1, lim1)
    b1 = jax.random.uniform(k2, (1, hidden_size), jnp.float32, -lim1, lim1)
    w2 = jax.random.uniform(k3, (hidden_size, num_actions), jnp.float32, -lim2, lim2)
    b2 = jax.random.uniform(k4, (1, num_actions), jnp.float32, -lim2, lim2)
    return w1, b1, w2, b2


if __name__ == "__main__":
    # Small shapes consistent with the module: batch=2 states of dim 4,
    # hidden=32, 4 actions.
    num_inputs, num_actions, hidden_size = 4, 4, 32
    batch = 2

    key = jax.random.PRNGKey(0)
    k_params, k_state = jax.random.split(key)
    w1, b1, w2, b2 = init_params(k_params, num_inputs, num_actions, hidden_size)
    state = jax.random.normal(k_state, (batch, num_inputs), jnp.float32)

    probs = policy_network_forward(state, w1, b1, w2, b2)
    probs = jax.block_until_ready(probs)

    # Reference in plain f32 JAX (same math as the PyTorch forward).
    h_ref = jnp.maximum(state @ w1 + b1, 0.0)
    ref = jax.nn.softmax(h_ref @ w2 + b2, axis=1)

    assert probs.shape == (batch, num_actions)
    # Kernel uses bf16 MXU operands (f32 accum) + approx reciprocal -> allow
    # ~1e-3-scale deviation from the f32 reference.
    assert jnp.allclose(probs, ref, atol=2e-2, rtol=2e-2)
    assert jnp.allclose(jnp.sum(probs, axis=1), 1.0, atol=1e-2)

    print("KERNEL_OK")
</pallas_src>

<mosaic_0001>
module attributes {stable_mosaic.version = 11 : i64} {
  func.func @_policy_kernel(%arg0: i32, %arg1: memref<8x4xf32, #tpu.memory_space<vmem>>, %arg2: memref<4x128xf32, #tpu.memory_space<vmem>>, %arg3: memref<1x128xf32, #tpu.memory_space<vmem>>, %arg4: memref<128x128xbf16, #tpu.memory_space<vmem>>, %arg5: memref<1x128xf32, #tpu.memory_space<vmem>>, %arg6: memref<8x128xf32, #tpu.memory_space<vmem>>) attributes {dimension_semantics = [#tpu.dimension_semantics<parallel>], iteration_bounds = array<i64: 1>, scalar_prefetch = 0 : i64, scratch_operands = 0 : i64, tpu.core_type = #tpu.core_type<tc>, window_params = [{transform_indices = @transform_0, window_bounds = array<i64: 8, 4>}, {pipeline_mode = #tpu.pipeline_mode<synchronous>, transform_indices = @transform_1, window_bounds = array<i64: 4, 128>}, {pipeline_mode = #tpu.pipeline_mode<synchronous>, transform_indices = @transform_2, window_bounds = array<i64: 1, 128>}, {pipeline_mode = #tpu.pipeline_mode<synchronous>, transform_indices = @transform_3, window_bounds = array<i64: 128, 128>}, {pipeline_mode = #tpu.pipeline_mode<synchronous>, transform_indices = @transform_4, window_bounds = array<i64: 1, 128>}, {transform_indices = @transform_5, window_bounds = array<i64: 8, 128>}]} {
    %c0 = arith.constant 0 : index
    %c0_0 = arith.constant 0 : index
    %0 = vector.load %arg1[%c0, %c0_0] : memref<8x4xf32, #tpu.memory_space<vmem>>, vector<8x4xf32>
    %c0_1 = arith.constant 0 : index
    %c0_2 = arith.constant 0 : index
    %1 = vector.load %arg2[%c0_1, %c0_2] : memref<4x128xf32, #tpu.memory_space<vmem>>, vector<4x128xf32>
    %2 = vector.extract_strided_slice %0 {offsets = [0, 0], sizes = [8, 1], strides = [1, 1]} : vector<8x4xf32> to vector<8x1xf32>
    %3 = vector.extract_strided_slice %1 {offsets = [0, 0], sizes = [1, 128], strides = [1, 1]} : vector<4x128xf32> to vector<1x128xf32>
    %4 = vector.broadcast %2 : vector<8x1xf32> to vector<8x128xf32>
    %5 = vector.broadcast %3 : vector<1x128xf32> to vector<8x128xf32>
    %6 = arith.mulf %4, %5 : vector<8x128xf32>
    %c0_3 = arith.constant 0 : index
    %c0_4 = arith.constant 0 : index
    %7 = vector.load %arg3[%c0_3, %c0_4] : memref<1x128xf32, #tpu.memory_space<vmem>>, vector<1x128xf32>
    %8 = vector.broadcast %7 : vector<1x128xf32> to vector<8x128xf32>
    %9 = arith.addf %6, %8 : vector<8x128xf32>
    %10 = vector.extract_strided_slice %0 {offsets = [0, 1], sizes = [8, 1], strides = [1, 1]} : vector<8x4xf32> to vector<8x1xf32>
    %11 = vector.extract_strided_slice %1 {offsets = [1, 0], sizes = [1, 128], strides = [1, 1]} : vector<4x128xf32> to vector<1x128xf32>
    %12 = vector.broadcast %10 : vector<8x1xf32> to vector<8x128xf32>
    %13 = vector.broadcast %11 : vector<1x128xf32> to vector<8x128xf32>
    %14 = arith.mulf %12, %13 : vector<8x128xf32>
    %15 = arith.addf %9, %14 : vector<8x128xf32>
    %16 = vector.extract_strided_slice %0 {offsets = [0, 2], sizes = [8, 1], strides = [1, 1]} : vector<8x4xf32> to vector<8x1xf32>
    %17 = vector.extract_strided_slice %1 {offsets = [2, 0], sizes = [1, 128], strides = [1, 1]} : vector<4x128xf32> to vector<1x128xf32>
    %18 = vector.broadcast %16 : vector<8x1xf32> to vector<8x128xf32>
    %19 = vector.broadcast %17 : vector<1x128xf32> to vector<8x128xf32>
    %20 = arith.mulf %18, %19 : vector<8x128xf32>
    %21 = arith.addf %15, %20 : vector<8x128xf32>
    %22 = vector.extract_strided_slice %0 {offsets = [0, 3], sizes = [8, 1], strides = [1, 1]} : vector<8x4xf32> to vector<8x1xf32>
    %23 = vector.extract_strided_slice %1 {offsets = [3, 0], sizes = [1, 128], strides = [1, 1]} : vector<4x128xf32> to vector<1x128xf32>
    %24 = vector.broadcast %22 : vector<8x1xf32> to vector<8x128xf32>
    %25 = vector.broadcast %23 : vector<1x128xf32> to vector<8x128xf32>
    %26 = arith.mulf %24, %25 : vector<8x128xf32>
    %27 = arith.addf %21, %26 : vector<8x128xf32>
    %cst = arith.constant 0.000000e+00 : f32
    %28 = vector.broadcast %cst : f32 to vector<8x128xf32>
    %29 = arith.maximumf %27, %28 : vector<8x128xf32>
    %30 = arith.truncf %29 : vector<8x128xf32> to vector<8x128xbf16>
    %c0_5 = arith.constant 0 : index
    %c0_6 = arith.constant 0 : index
    %31 = vector.load %arg4[%c0_5, %c0_6] : memref<128x128xbf16, #tpu.memory_space<vmem>>, vector<128x128xbf16>
    %cst_7 = arith.constant dense<0.000000e+00> : vector<8x128xf32>
    %32 = tpu.matmul %30, %31, %cst_7 {dimension_numbers = #tpu.dot_dimension_numbers<[1], [0], [0], [1], [0, 0, 1, 1], [], []>} : vector<8x128xbf16>, vector<128x128xbf16>, vector<8x128xf32> -> vector<8x128xf32>
    %c0_8 = arith.constant 0 : index
    %c0_9 = arith.constant 0 : index
    %33 = vector.load %arg5[%c0_8, %c0_9] : memref<1x128xf32, #tpu.memory_space<vmem>>, vector<1x128xf32>
    %34 = vector.broadcast %33 : vector<1x128xf32> to vector<8x128xf32>
    %35 = arith.addf %32, %34 : vector<8x128xf32>
    %cst_10 = arith.constant dense<0xFF800000> : vector<8xf32>
    %36 = vector.multi_reduction <maximumf>, %35, %cst_10 [1] : vector<8x128xf32> to vector<8xf32>
    %37 = vector.shape_cast %36 : vector<8xf32> to vector<8x1xf32>
    %38 = vector.broadcast %37 : vector<8x1xf32> to vector<8x128xf32>
    %39 = arith.subf %35, %38 : vector<8x128xf32>
    %40 = math.exp %39 : vector<8x128xf32>
    %cst_11 = arith.constant dense<0.000000e+00> : vector<8xf32>
    %41 = vector.multi_reduction <add>, %40, %cst_11 [1] : vector<8x128xf32> to vector<8xf32>
    %42 = vector.shape_cast %41 : vector<8xf32> to vector<8x1xf32>
    %43 = tpu.reciprocal %42 {approx = true} : vector<8x1xf32> -> vector<8x1xf32>
    %44 = vector.broadcast %43 : vector<8x1xf32> to vector<8x128xf32>
    %45 = arith.mulf %40, %44 : vector<8x128xf32>
    %c0_12 = arith.constant 0 : index
    %c0_13 = arith.constant 0 : index
    %46 = vector.load %arg6[%c0_12, %c0_13] : memref<8x128xf32, #tpu.memory_space<vmem>>, vector<8x128xf32>
    tpu.vector_store %arg6[%c0_12, %c0_13], %45 {strides = array<i32>} : memref<8x128xf32, #tpu.memory_space<vmem>>, vector<8x128xf32>,
    return
  }
  func.func @transform_0(%arg0: i32) -> (i32, i32) {
    %c0_i32 = arith.constant 0 : i32
    %c0_i32_0 = arith.constant 0 : i32
    return %arg0, %c0_i32 : i32, i32
  }
  func.func @transform_1(%arg0: i32) -> (i32, i32) {
    %c0_i32 = arith.constant 0 : i32
    %c0_i32_0 = arith.constant 0 : i32
    %c0_i32_1 = arith.constant 0 : i32
    return %c0_i32, %c0_i32_0 : i32, i32
  }
  func.func @transform_2(%arg0: i32) -> (i32, i32) {
    %c0_i32 = arith.constant 0 : i32
    %c0_i32_0 = arith.constant 0 : i32
    %c0_i32_1 = arith.constant 0 : i32
    return %c0_i32, %c0_i32_0 : i32, i32
  }
  func.func @transform_3(%arg0: i32) -> (i32, i32) {
    %c0_i32 = arith.constant 0 : i32
    %c0_i32_0 = arith.constant 0 : i32
    %c0_i32_1 = arith.constant 0 : i32
    return %c0_i32, %c0_i32_0 : i32, i32
  }
  func.func @transform_4(%arg0: i32) -> (i32, i32) {
    %c0_i32 = arith.constant 0 : i32
    %c0_i32_0 = arith.constant 0 : i32
    %c0_i32_1 = arith.constant 0 : i32
    return %c0_i32, %c0_i32_0 : i32, i32
  }
  func.func @transform_5(%arg0: i32) -> (i32, i32) {
    %c0_i32 = arith.constant 0 : i32
    %c0_i32_0 = arith.constant 0 : i32
    return %arg0, %c0_i32 : i32, i32
  }
}

</mosaic_0001>

<llo_original>
// kernel: policy_network_forward.1
$region0: #{policy_network_forward.1}
  #allocation0 [shape = 'u32[]', space=smem, size = 0x4, offset = 0x4, fixed_abs, tag = 'smem constant byte address 0x4 - core index']
  #allocation1 [shape = 'u32[72,128]{1,0:T(1,128)}', space=vmem, size = 0x9000, scoped, tag = 'internal scratch']
  %s0 = inlined_call_operand.vmem [shape: f32[8,4], index: 0, kind: input, shape index: {}]
  %s1 = inlined_call_operand.vmem [shape: f32[4,128], index: 1, kind: input, shape index: {}]
  %s2 = inlined_call_operand.vmem [shape: f32[1,128], index: 2, kind: input, shape index: {}]
  %s3 = inlined_call_operand.vmem [shape: bf16[128,128], index: 3, kind: input, shape index: {}]
  %s4 = inlined_call_operand.vmem [shape: f32[1,128], index: 4, kind: input, shape index: {}]
  %s5 = inlined_call_operand.vmem [shape: f32[8,128], index: 5, kind: output, shape index: {}]
  %s6 = sld [smem:[#allocation0]]
  $region30: #{policy_network_forward.1} parent=0
    _
  %s8 = ssub.s32 1, %s6
  %s9 = scalar_select 0, %s8, %s6
  // Predicated region
  $region2: #{policy_network_forward.1} parent=0 // pred_check
    _
  $region3: #{policy_network_forward.1} parent=0 // pred_check_branch
    %11 = sbr.rel (0) target = $region5
  $region4: #{policy_network_forward.1} parent=0 // pred_region
    _
  $region5: #{policy_network_forward.1} parent=0 // pred_fallthru
    _
  // Predicated region
  $region6: #{policy_network_forward.1} parent=0 // pred_check
    _
  $region7: #{policy_network_forward.1} parent=0 // pred_check_branch
    %13 = sbr.rel (0) target = $region9
  $region8: #{policy_network_forward.1} parent=0 // pred_region
    _
  $region9: #{policy_network_forward.1} parent=0 // pred_fallthru
    _
  // Predicated region
  $region10: #{policy_network_forward.1} parent=0 // pred_check
    _
  $region11: #{policy_network_forward.1} parent=0 // pred_check_branch
    %15 = sbr.rel (0) target = $region13
  $region12: #{policy_network_forward.1} parent=0 // pred_region
    _
  $region13: #{policy_network_forward.1} parent=0 // pred_fallthru
    _
  // Predicated region
  $region14: #{policy_network_forward.1} parent=0 // pred_check
    _
  $region15: #{policy_network_forward.1} parent=0 // pred_check_branch
    %17 = sbr.rel (0) target = $region17
  $region16: #{policy_network_forward.1} parent=0 // pred_region
    _
  $region17: #{policy_network_forward.1} parent=0 // pred_fallthru
    _
  // Predicated region
  $region18: #{policy_network_forward.1} parent=0 // pred_check
    _
  $region19: #{policy_network_forward.1} parent=0 // pred_check_branch
    %19 = sbr.rel (0) target = $region21
  $region20: #{policy_network_forward.1} parent=0 // pred_region
    _
  $region21: #{policy_network_forward.1} parent=0 // pred_fallthru
    _
  %v20 = vld [vmem:[%s0] sm:$0xff]
  %v21 = vld [vmem:[%s1] sm:$0xf]
  %23 = vset.pattern.permute.xlu0 0
  %24 = vperm.xlu0 %23, %v20
  %v25 = vpop.permute.xlu0 %24
  %v27 = vperm.slane %v21, 0
  %v28 = vmul.f32 %v25, %v27
  %v29 = vld [vmem:[%s2] sm:$0x1]
  %v31 = vperm.slane %v29, 0
  %v33 = vadd.f32 %v28, %v31
  %34 = vset.pattern.permute.xlu0 1
  %35 = vperm.xlu0 %34, %v20
  %v36 = vpop.permute.xlu0 %35
  %v38 = vperm.slane %v21, 1
  %v39 = vmul.f32 %v36, %v38
  %v40 = vadd.f32 %v33, %v39
  %41 = vset.pattern.permute.xlu0 2
  %42 = vperm.xlu0 %41, %v20
  %v43 = vpop.permute.xlu0 %42
  %v45 = vperm.slane %v21, 2
  %v46 = vmul.f32 %v43, %v45
  %v47 = vadd.f32 %v40, %v46
  %48 = vset.pattern.permute.xlu0 3
  %49 = vperm.xlu0 %48, %v20
  %v50 = vpop.permute.xlu0 %49
  %v52 = vperm.slane %v21, 3
  %v53 = vmul.f32 %v50, %v52
  %v54 = vadd.f32 %v47, %v53
  %v55 = vmax.f32 %v54, 0.0
  %v56 = vpack.c.bf16 %v55, %v55
  %v57 = vld [vmem:[%s3] sm:$0xf]
  %v58 = vld [vmem:[%s3 + $0x4] sm:$0xf]
  %v59 = vld [vmem:[%s3 + $0x8] sm:$0xf]
  %v60 = vld [vmem:[%s3 + $0xc] sm:$0xf]
  %v61 = vld [vmem:[%s3 + $0x10] sm:$0xf]
  %v62 = vld [vmem:[%s3 + $0x14] sm:$0xf]
  %v63 = vld [vmem:[%s3 + $0x18] sm:$0xf]
  %v64 = vld [vmem:[%s3 + $0x1c] sm:$0xf]
  %v65 = vld [vmem:[%s3 + $0x20] sm:$0xf]
  %v66 = vld [vmem:[%s3 + $0x24] sm:$0xf]
  %v67 = vld [vmem:[%s3 + $0x28] sm:$0xf]
  %v68 = vld [vmem:[%s3 + $0x2c] sm:$0xf]
  %v69 = vld [vmem:[%s3 + $0x30] sm:$0xf]
  %v70 = vld [vmem:[%s3 + $0x34] sm:$0xf]
  %v71 = vld [vmem:[%s3 + $0x38] sm:$0xf]
  %v72 = vld [vmem:[%s3 + $0x3c] sm:$0xf]
  %v73 = vld [vmem:[%s4] sm:$0x1]
  %v75 = vperm.slane %v73, 0
  %v93 = vunpack.c.l.b16 %v57
  %v94 = vunpack.c.l.b16 %v58
  %v95 = vunpack.c.l.b16 %v59
  %v96 = vunpack.c.l.b16 %v60
  %v97 = vunpack.c.l.b16 %v61
  %v98 = vunpack.c.l.b16 %v62
  %v99 = vunpack.c.l.b16 %v63
  %v100 = vunpack.c.l.b16 %v64
  %v101 = vunpack.c.l.b16 %v65
  %v102 = vunpack.c.l.b16 %v66
  %v103 = vunpack.c.l.b16 %v67
  %v104 = vunpack.c.l.b16 %v68
  %v105 = vunpack.c.l.b16 %v69
  %v106 = vunpack.c.l.b16 %v70
  %v107 = vunpack.c.l.b16 %v71
  %v108 = vunpack.c.l.b16 %v72
  %v109 = vpack.c.b16 %v94, %v93
  %v110 = vpack.c.b16 %v96, %v95
  %v111 = vpack.c.b16 %v98, %v97
  %v112 = vpack.c.b16 %v100, %v99
  %v113 = vpack.c.b16 %v102, %v101
  %v114 = vpack.c.b16 %v104, %v103
  %v115 = vpack.c.b16 %v106, %v105
  %v116 = vpack.c.b16 %v108, %v107
  %125 = vmatpush.bf16.msra.mxu0 %v116
  %126 = vmatpush.bf16.msra.mxu0 %v115
  %127 = vmatpush.bf16.msra.mxu0 %v114
  %128 = vmatpush.bf16.msra.mxu0 %v113
  %129 = vmatpush.bf16.msra.mxu0 %v112
  %130 = vmatpush.bf16.msra.mxu0 %v111
  %131 = vmatpush.bf16.msra.mxu0 %v110
  %132 = vmatpush.bf16.msra.mxu0 %v109
  %133 = vmatmul.bf16.gmra.mxu0 %v56
  %v134 = vpop.f32.mrf.mxu0
  %v135 = vadd.f32 %v75, %v134
  %v136 = vpop.f32.mrf.mxu0
  %137 = vdwg.mxu0
  %138 = vmax.xlane.f32.xlu0 %v135
  %v139 = vpop.xlane.xlu0 %138
  %v140 = vsub.f32 %v135, %v139
  %v141 = vmul.f32 %v140, 1.442695
  %v142 = vpow.pop %v141
  %143 = vadd.xlane.f32.xlu0 %v142
  %v144 = vpop.xlane.xlu0 %143
  %v145 = vrcp.pop %v144
  %v146 = vmul.f32 %v142, %v145
  %147 = vst [vmem:[%s5] sm:$0xff] %v146
  // Predicated region
  $region22: #{policy_network_forward.1} parent=0 // pred_check
    _
  $region23: #{policy_network_forward.1} parent=0 // pred_check_branch
    %149 = sbr.rel (0) target = $region25
  $region24: #{policy_network_forward.1} parent=0 // pred_region
    _
  $region25: #{policy_network_forward.1} parent=0 // pred_fallthru
    _
  // Predicated region
  $region26: #{policy_network_forward.1} parent=0 // pred_check
    _
  $region27: #{policy_network_forward.1} parent=0 // pred_check_branch
    %151 = sbr.rel (0) target = $region29
  $region28: #{policy_network_forward.1} parent=0 // pred_region
    _
  $region29: #{policy_network_forward.1} parent=0 // pred_fallthru
    _

</llo_original>
